<compile_context>
chip_gen: v5e
topology: v5e:2x2
jax: 0.10.0
libtpu: 0.0.40
codegen_flags: <defaults>
</compile_context>

<pallas_src>
import math

import jax
import jax.numpy as jnp
from jax.experimental import pallas as pl
from jax.experimental.pallas import tpu as pltpu

_MIB = 1024 * 1024


def _round_up(v, m):
    return ((v + m - 1) // m) * m


def _tpu_vmem_and_cores():
    """Best-effort hardware query; conservative (v7x-safe) defaults otherwise."""
    vmem_cap = 64 * _MIB      # smallest per-TensorCore VMEM across v5e/v6e/v7x
    num_cores = 1
    try:
        info = pltpu.get_tpu_info()
        cap = getattr(info, "vmem_capacity_bytes", None)
        if cap:
            vmem_cap = int(cap)
        for attr in ("num_tensorcores", "tensorcore_count", "num_cores", "core_count"):
            v = getattr(info, attr, None)
            if isinstance(v, int) and v > 0:
                num_cores = v
                break
    except Exception:
        pass                   # not queryable: keep conservative defaults
    return vmem_cap, num_cores


# ---------------------------------------------------------------------------
# Kernels
# ---------------------------------------------------------------------------
def _rowwise_bn_kernel(x_ref, params_ref, o_ref):
    # x_ref:      (tm, t_hw) tile, one row per (n, c) pair
    # params_ref: (tm, 2)    per-row [scale, shift]
    # NOTE: padded boundary rows/cols compute garbage*garbage (possibly inf);
    # harmless because the op is purely elementwise and masked on writeback.
    # Do NOT add any reduction over the tile here.
    scale = params_ref[:, 0:1]
    shift = params_ref[:, 1:2]
    o_ref[...] = (x_ref[...] * scale + shift).astype(o_ref.dtype)


def _grouped_bn_kernel(x_ref, params_ref, o_ref):
    # x_ref:      (tn, tp, tl) tile of the (N, C//g, g*HW) view (lane dense)
    # params_ref: (2,  tp, tl) pre-expanded [scale; shift] slab tile (f32)
    scale = params_ref[0:1]
    shift = params_ref[1:2]
    o_ref[...] = (x_ref[...] * scale + shift).astype(o_ref.dtype)


# ---------------------------------------------------------------------------
# Wrappers
# ---------------------------------------------------------------------------
def _rowwise_forward(x2d, params, NC, HW, itemsize, sub, ws_budget,
                     x_block_target, vmem_cap, num_cores, out_dtype):
    hw_pad = _round_up(HW, 128)

    # Spatial tile: tile with a 128-multiple width whenever even a minimal-depth
    # slab of the full row exceeds the block budget (no HW%128 gate); only the
    # final j-block is masked when HW is not 128-aligned.
    if sub * hw_pad * itemsize > x_block_target:
        t_hw = max(128, (x_block_target // (sub * itemsize)) // 128 * 128)
        if t_hw >= HW:
            t_hw = HW                      # full extent (always legal)
    else:
        t_hw = HW
    thw_pad = _round_up(t_hw, 128)

    # Rows per block from the *padded* VMEM footprint:
    #   x in + out, double buffered : 4 * tm * round_up(t_hw,128) * itemsize
    #   (tm, 2) params pads to 128 lanes, double buffered: 2 * ru(tm,8)*128*4
    per_row = 4 * thw_pad * itemsize + 2 * 128 * 4
    tm = ws_budget // per_row
    tm = min(tm, max(1, x_block_target // (thw_pad * itemsize)))
    tm = max(sub, (tm // sub) * sub)
    tm = min(tm, NC)                        # == NC -> full extent (legal)

    # Only a multi-TensorCore part (v7x) benefits from forcing >1 grid step.
    if num_cores > 1 and tm > sub and pl.cdiv(NC, tm) * pl.cdiv(HW, t_hw) < num_cores:
        tm = max(sub, (tm // num_cores // sub) * sub)

    # HW axis (j) innermost: params block index (i, 0) is unchanged across the
    # inner loop, so the small params DMA is not re-issued per step.
    grid = (pl.cdiv(NC, tm), pl.cdiv(HW, t_hw))

    footprint = 4 * tm * thw_pad * itemsize + 2 * _round_up(tm, 8) * 128 * 4
    vmem_limit = int(min(vmem_cap - 8 * _MIB, max(32 * _MIB, footprint + 8 * _MIB)))

    cost = pl.CostEstimate(
        flops=2 * NC * HW,
        transcendentals=0,
        bytes_accessed=2 * NC * HW * itemsize + int(params.size) * 4,
    )

    return pl.pallas_call(
        _rowwise_bn_kernel,
        out_shape=jax.ShapeDtypeStruct((NC, HW), out_dtype),
        grid_spec=pltpu.PrefetchScalarGridSpec(
            num_scalar_prefetch=0,
            grid=grid,
            in_specs=[
                pl.BlockSpec((tm, t_hw), lambda i, j: (i, j)),
                pl.BlockSpec((tm, 2), lambda i, j: (i, 0)),
            ],
            out_specs=pl.BlockSpec((tm, t_hw), lambda i, j: (i, j)),
        ),
        compiler_params=pltpu.CompilerParams(
            dimension_semantics=("parallel", "parallel"),
            vmem_limit_bytes=vmem_limit,
        ),
        cost_estimate=cost,
    )(x2d, params)


def _grouped_forward(x3, params, N, P, L, itemsize, sub, ws_budget,
                     x_block_target, vmem_cap, out_dtype):
    # Per-element VMEM cost: x in + out double buffered (4*itemsize bytes) plus
    # the f32 [scale; shift] slab tile double buffered (16 bytes).  L is a
    # multiple of 128, so there is no lane padding to account for.
    elem_budget = max(sub * 128,
                      min(ws_budget // (4 * itemsize + 16),
                          x_block_target // itemsize))
    if sub * L <= elem_budget:
        tl = L                                  # fully contiguous row DMA
        tp = max(sub, (elem_budget // L // sub) * sub)
        tp = min(tp, P)                         # == P -> full extent (legal)
    else:
        tl = max(128, (elem_budget // sub) // 128 * 128)
        tl = min(tl, L)
        tp = min(sub, P)

    # When a whole image's (P, L) slab is small, block several images per grid
    # step to amortize the ~0.35us per-step overhead.
    tn = 1
    if tp == P and tl == L:
        x_elems = min(x_block_target // itemsize,
                      max(1, (ws_budget - 16 * P * L) // (4 * itemsize)))
        tn = max(1, min(N, x_elems // (P * L)))

    # N innermost: the params block index (0, p, j) is constant across the
    # inner loop, so the slab is fetched once per (p, j) and reused for all n.
    grid = (pl.cdiv(P, tp), pl.cdiv(L, tl), pl.cdiv(N, tn))

    footprint = 4 * itemsize * tn * tp * tl + 16 * tp * tl
    vmem_limit = int(min(vmem_cap - 8 * _MIB, max(32 * _MIB, footprint + 8 * _MIB)))

    cost = pl.CostEstimate(
        flops=2 * N * P * L,
        transcendentals=0,
        bytes_accessed=2 * N * P * L * itemsize + int(params.size) * 4,
    )

    return pl.pallas_call(
        _grouped_bn_kernel,
        out_shape=jax.ShapeDtypeStruct((N, P, L), out_dtype),
        grid_spec=pltpu.PrefetchScalarGridSpec(
            num_scalar_prefetch=0,
            grid=grid,
            in_specs=[
                pl.BlockSpec((tn, tp, tl), lambda p, j, n: (n, p, j)),
                pl.BlockSpec((2, tp, tl), lambda p, j, n: (0, p, j)),
            ],
            out_specs=pl.BlockSpec((tn, tp, tl), lambda p, j, n: (n, p, j)),
        ),
        compiler_params=pltpu.CompilerParams(
            dimension_semantics=("parallel", "parallel", "parallel"),
            vmem_limit_bytes=vmem_limit,
        ),
        cost_estimate=cost,
    )(x3, params)


def frozen_batch_norm_2d(x, weight, bias, running_mean, running_var, *,
                         eps=0.0, target_block_bytes=8 * _MIB):
    """Forward of FrozenBatchNorm2d.

    x: (N, C, H, W).  weight/bias/running_mean/running_var: (C,).
    eps defaults to 0.0 to match the reference module exactly (bare
    running_var.rsqrt()); torchvision's variant would pass eps=1e-5.
    Output keeps x.dtype (for bf16 x PyTorch type-promotion would give f32;
    numerics are done in f32 here either way).
    """
    N, C, H, W = x.shape
    HW = H * W
    NC = N * C
    itemsize = jnp.dtype(x.dtype).itemsize
    sub = max(8, 32 // itemsize)            # dtype-native sublane multiple

    # ---- parameter glue (identical math to the PyTorch forward) ------------
    w32 = weight.astype(jnp.float32)
    scale = w32 * jax.lax.rsqrt(running_var.astype(jnp.float32) + eps)   # (C,)
    shift = bias.astype(jnp.float32) - running_mean.astype(jnp.float32) * scale

    vmem_cap, num_cores = _tpu_vmem_and_cores()
    ws_budget = min(48 * _MIB, max(24 * _MIB, vmem_cap // 2))
    x_block_target = max(_MIB, min(target_block_bytes, ws_budget // 4))

    # ---- small / misaligned HW: group g channels per row so the last axis
    # (g*HW) is a multiple of 128 -> lane-dense, unmasked loads and stores.
    g = 128 // math.gcd(HW, 128)            # minimal g with (g*HW) % 128 == 0
    slab_bytes = 2 * C * HW * 4             # one-time pre-expanded params slab
    use_grouped = (HW % 128 != 0) and (C % g == 0) and (slab_bytes <= 8 * _MIB)

    if use_grouped:
        P, L = C // g, g * HW
        x3 = x.reshape(N, P, L)             # pure reshape of contiguous memory
        scale_slab = jnp.repeat(scale, HW).reshape(P, L)
        shift_slab = jnp.repeat(shift, HW).reshape(P, L)
        params = jnp.stack([scale_slab, shift_slab], axis=0)   # (2, P, L) f32
        out3 = _grouped_forward(x3, params, N, P, L, itemsize, sub, ws_budget,
                                x_block_target, vmem_cap, x.dtype)
        return out3.reshape(N, C, H, W)

    # ---- general path: one row per (n, c); tiny per-row [scale, shift] stream.
    x2d = x.reshape(NC, HW)
    scale_rows = jnp.broadcast_to(scale[None, :], (N, C)).reshape(NC)
    shift_rows = jnp.broadcast_to(shift[None, :], (N, C)).reshape(NC)
    params = jnp.stack([scale_rows, shift_rows], axis=1)        # (NC, 2) f32
    out2d = _rowwise_forward(x2d, params, NC, HW, itemsize, sub, ws_budget,
                             x_block_target, vmem_cap, num_cores, x.dtype)
    return out2d.reshape(N, C, H, W)


if __name__ == "__main__":
    key = jax.random.PRNGKey(0)

    def ref_fn(x, weight, bias, running_mean, running_var):
        s = (weight * jax.lax.rsqrt(running_var)).reshape(1, -1, 1, 1)
        b = (bias - running_mean * weight * jax.lax.rsqrt(running_var)).reshape(1, -1, 1, 1)
        return x * s + b

    def run_case(k, N, C, H, W):
        kx, kw, kb, km, kv = jax.random.split(k, 5)
        x = jax.random.normal(kx, (N, C, H, W), dtype=jnp.float32)
        # Module __init__ gives ones/zeros; use nontrivial deterministic values
        # so the affine actually does something.
        weight = 1.0 + 0.1 * jax.random.normal(kw, (C,), dtype=jnp.float32)
        bias = 0.1 * jax.random.normal(kb, (C,), dtype=jnp.float32)
        running_mean = 0.1 * jax.random.normal(km, (C,), dtype=jnp.float32)
        running_var = 1.0 + 0.1 * jax.random.uniform(kv, (C,), dtype=jnp.float32)

        out = jax.block_until_ready(
            frozen_batch_norm_2d(x, weight, bias, running_mean, running_var))
        ref = ref_fn(x, weight, bias, running_mean, running_var)
        assert out.shape == (N, C, H, W)
        assert jnp.allclose(out, ref, atol=1e-5, rtol=1e-5), (N, C, H, W)

    k1, k2, k3 = jax.random.split(key, 3)
    # Primary small case (HW multiple of 128 -> row-wise lane-dense path).
    run_case(k1, 2, 4, 16, 16)
    # Small misaligned HW (7x7) with enough channels -> grouped lane-dense path.
    run_case(k2, 2, 128, 7, 7)
    # Misaligned HW with few channels -> row-wise fallback (masked stores).
    run_case(k3, 2, 3, 7, 7)
    print("KERNEL_OK")
</pallas_src>

<mosaic_0001>
module attributes {stable_mosaic.version = 11 : i64} {
  func.func @_rowwise_bn_kernel(%arg0: i32, %arg1: i32, %arg2: memref<8x256xf32, #tpu.memory_space<vmem>>, %arg3: memref<8x2xf32, #tpu.memory_space<vmem>>, %arg4: memref<8x256xf32, #tpu.memory_space<vmem>>) attributes {dimension_semantics = [#tpu.dimension_semantics<parallel>, #tpu.dimension_semantics<parallel>], iteration_bounds = array<i64: 1, 1>, scalar_prefetch = 0 : i64, scratch_operands = 0 : i64, tpu.core_type = #tpu.core_type<tc>, window_params = [{transform_indices = @transform_0, window_bounds = array<i64: 8, 256>}, {transform_indices = @transform_1, window_bounds = array<i64: 8, 2>}, {transform_indices = @transform_2, window_bounds = array<i64: 8, 256>}]} {
    %c0 = arith.constant 0 : index
    %c0_0 = arith.constant 0 : index
    %0 = vector.load %arg3[%c0, %c0_0] : memref<8x2xf32, #tpu.memory_space<vmem>>, vector<8x1xf32>
    %c0_1 = arith.constant 0 : index
    %c1 = arith.constant 1 : index
    %1 = vector.load %arg3[%c0_1, %c1] : memref<8x2xf32, #tpu.memory_space<vmem>>, vector<8x1xf32>
    %c0_2 = arith.constant 0 : index
    %c0_3 = arith.constant 0 : index
    %2 = vector.load %arg2[%c0_2, %c0_3] : memref<8x256xf32, #tpu.memory_space<vmem>>, vector<8x256xf32>
    %3 = vector.broadcast %0 : vector<8x1xf32> to vector<8x256xf32>
    %4 = arith.mulf %2, %3 : vector<8x256xf32>
    %5 = vector.broadcast %1 : vector<8x1xf32> to vector<8x256xf32>
    %6 = arith.addf %4, %5 : vector<8x256xf32>
    %c0_4 = arith.constant 0 : index
    %c0_5 = arith.constant 0 : index
    %7 = vector.load %arg4[%c0_4, %c0_5] : memref<8x256xf32, #tpu.memory_space<vmem>>, vector<8x256xf32>
    tpu.vector_store %arg4[%c0_4, %c0_5], %6 {strides = array<i32>} : memref<8x256xf32, #tpu.memory_space<vmem>>, vector<8x256xf32>,
    return
  }
  func.func @transform_0(%arg0: i32, %arg1: i32) -> (i32, i32) {
    %c0_i32 = arith.constant 0 : i32
    return %arg0, %arg1 : i32, i32
  }
  func.func @transform_1(%arg0: i32, %arg1: i32) -> (i32, i32) {
    %c0_i32 = arith.constant 0 : i32
    %c0_i32_0 = arith.constant 0 : i32
    return %arg0, %c0_i32 : i32, i32
  }
  func.func @transform_2(%arg0: i32, %arg1: i32) -> (i32, i32) {
    %c0_i32 = arith.constant 0 : i32
    return %arg0, %arg1 : i32, i32
  }
}

</mosaic_0001>

<llo_original>
// kernel: tpu_custom_call.1
$region0: #{tpu_custom_call.1}
  #allocation0 [shape = 'u32[]', space=smem, size = 0x4, offset = 0x4, fixed_abs, tag = 'smem constant byte address 0x4 - core index']
  #allocation1 [shape = 'u32[72,128]{1,0:T(1,128)}', space=vmem, size = 0x9000, scoped, tag = 'internal scratch']
  %s0 = inlined_call_operand.hbm [shape: f32[8,256], index: 0, kind: input, shape index: {}]
  %s1 = inlined_call_operand.vmem [shape: f32[8,2], index: 1, kind: input, shape index: {}]
  %s2 = inlined_call_operand.hbm [shape: f32[8,256], index: 2, kind: output, shape index: {}]
  %s3 = sld [smem:[#allocation0]]
  $region22: #{tpu_custom_call.1} parent=0
    _
  %s5 = ssub.s32 1, %s3
  %s6 = scalar_select 0, %s5, %s3
  $region1: #{tpu_custom_call.1} parent=0
    #allocation2 [shape = 'u8[8192]{0}', space=vmem, size = 0x2000, scoped, tag = 'input window, operand 0, single buffered']
    #allocation3 [shape = 's32[1]{0}', space=sflag, size = 0x4, scoped, tag = 'scoped memory for tpu_custom_call.1']
    #allocation4 [shape = 's32[1]{0}', space=sflag, size = 0x4, scoped, tag = 'scoped memory for tpu_custom_call.1']
    #allocation5 [shape = 'u8[8192]{0}', space=vmem, size = 0x2000, scoped, tag = 'output window, operand 0, single buffered']
    %7 = vsyncpa [#allocation3], 0
    %8 = vsyncpa [#allocation4], 0
    // Predicated region
    $region2: #{tpu_custom_call.1} parent=1 // pred_check
      _
    $region3: #{tpu_custom_call.1} parent=1 // pred_check_branch
      %10 = sbr.rel (0) target = $region5
    $region4: #{tpu_custom_call.1} parent=1 // pred_region
      %12 = vsyncadd [#allocation3], 0
      %s14 = sshll.u32 %s0, 4
      %s15 = int_to_ptr.hbm [resolvable:$true] %s14
      %s16 = sshll.u32 [#allocation2], 4
      %s17 = int_to_ptr.vmem [resolvable:$true] %s16
      %19 = dma.hbm_to_vmem [thread:$0]  %s15, 256, %s17, [#allocation3]
    $region5: #{tpu_custom_call.1} parent=1 // pred_fallthru
      _
    // Predicated region
    $region6: #{tpu_custom_call.1} parent=1 // pred_check
      _
    $region7: #{tpu_custom_call.1} parent=1 // pred_check_branch
      %21 = sbr.rel (0) target = $region9
    $region8: #{tpu_custom_call.1} parent=1 // pred_region
      _
    $region9: #{tpu_custom_call.1} parent=1 // pred_fallthru
      _
    // Predicated region
    $region10: #{tpu_custom_call.1} parent=1 // pred_check
      _
    $region11: #{tpu_custom_call.1} parent=1 // pred_check_branch
      %23 = sbr.rel (0) target = $region13
    $region12: #{tpu_custom_call.1} parent=1 // pred_region
      %25 = dma.done [#allocation3], 256
    $region13: #{tpu_custom_call.1} parent=1 // pred_fallthru
      _
    %v26 = vld [vmem:[%s1] sm:$0xff]
    %v27 = vld [vmem:[#allocation2] sm:$0xff]
    %v28 = vld [vmem:[#allocation2 + $0x8] sm:$0xff]
    %30 = vset.pattern.permute.xlu0 0
    %31 = vperm.xlu0 %30, %v26
    %v32 = vpop.permute.xlu0 %31
    %v34 = vmul.f32 %v27, %v32
    %v35 = vmul.f32 %v28, %v32
    %36 = vset.pattern.permute.xlu0 1
    %37 = vperm.xlu0 %36, %v26
    %v38 = vpop.permute.xlu0 %37
    %v40 = vadd.f32 %v34, %v38
    %v41 = vadd.f32 %v35, %v38
    %42 = vst [vmem:[#allocation5] sm:$0xff] %v40
    %43 = vst [vmem:[#allocation5 + $0x8] sm:$0xff] %v41
    // Predicated region
    $region14: #{tpu_custom_call.1} parent=1 // pred_check
      _
    $region15: #{tpu_custom_call.1} parent=1 // pred_check_branch
      %45 = sbr.rel (0) target = $region17
    $region16: #{tpu_custom_call.1} parent=1 // pred_region
      %47 = vsyncadd [#allocation4], 0
      %s49 = sshll.u32 [#allocation5], 4
      %s50 = int_to_ptr.vmem [resolvable:$true] %s49
      %s51 = sshll.u32 %s2, 4
      %s52 = int_to_ptr.hbm [resolvable:$true] %s51
      %54 = dma.vmem_to_hbm [thread:$0]  %s50, 256, %s52, [#allocation4]
    $region17: #{tpu_custom_call.1} parent=1 // pred_fallthru
      _
    // Predicated region
    $region18: #{tpu_custom_call.1} parent=1 // pred_check
      _
    $region19: #{tpu_custom_call.1} parent=1 // pred_check_branch
      %56 = sbr.rel (0) target = $region21
    $region20: #{tpu_custom_call.1} parent=1 // pred_region
      %58 = dma.done [#allocation4], 256
    $region21: #{tpu_custom_call.1} parent=1 // pred_fallthru
      _
    %59 = vsyncpa [#allocation3], 1
    %60 = vsyncpa [#allocation4], 1

</llo_original>
